<compile_context>
chip_gen: v5e
topology: v5e:2x2
jax: 0.10.0
libtpu: 0.0.40
codegen_flags: <defaults>
</compile_context>

<pallas_src>
import jax
import jax.numpy as jnp
from jax.experimental import pallas as pl
from jax.experimental.pallas import tpu as pltpu

DIM = 93
HIDDEN = 100
HIDDEN_PAD = 128            # lane-aligned hidden width (extra cols/rows are zero)
MAX_TILE_B = 8192           # ~3 MiB f32 x per tile; ~6 MiB double-buffered
SPLIT_B = 1024              # above this, force >= 2 grid steps (v7x has 2 TCs)
VMEM_LIMIT_BYTES = 32 * 1024 * 1024


def _round_up(n, m):
    return ((n + m - 1) // m) * m


def mlp_kernel(x_ref, w1_ref, b1_ref, w2_ref, b2_ref, o_ref):
    # x:  (TILE_B, DIM)       f32 or bf16 (pipelined batch tile)
    # w1: (DIM, HIDDEN_PAD)   VMEM-resident, zero-padded cols
    # b1: (1, HIDDEN_PAD)     VMEM-resident, zero-padded
    # w2: (1, HIDDEN_PAD)     fc2 weight as a zero-padded row, VMEM-resident
    # b2: (1, 1)              SMEM scalar
    # o:  (TILE_B, 1)         f32
    x = x_ref[...]
    h = jnp.dot(x, w1_ref[...], preferred_element_type=jnp.float32) + b1_ref[...]
    h = jnp.maximum(h, 0.0)  # ReLU; padded lanes stay exactly 0 (w1/b1 pad is 0)
    # N=1 second layer: VPU multiply + XLU lane reduction (keeps the MXU free).
    # TODO(synk): if a v6e/v7x bundle dump shows the 2-unit XLU saturating, switch to
    # an MXU pass (jnp.dot(h, w2 padded to (HIDDEN_PAD, 128)), take column 0).
    y = jnp.sum(h * w2_ref[...], axis=-1, keepdims=True) + b2_ref[0, 0]
    o_ref[...] = y.astype(o_ref.dtype)


def mymodel_forward(x, w1, b1, w2, b2):
    """x: (B, DIM); w1: (DIM, HIDDEN); b1: (HIDDEN,); w2: (HIDDEN, 1); b2: (1,)."""
    B, dim = x.shape
    assert dim == DIM

    # Use bf16 on the MXU only if x already arrives in bf16 (never cast x here:
    # a wrapper-side astype would add a full HBM read+write pass of its own).
    compute_dtype = jnp.bfloat16 if x.dtype == jnp.bfloat16 else jnp.float32
    sublane = 16 if compute_dtype == jnp.bfloat16 else 8

    # --- weight-side padding to the 128-lane boundary (zeros => no numeric change) ---
    hpad = HIDDEN_PAD - HIDDEN
    w1p = jnp.pad(w1.astype(compute_dtype), ((0, 0), (0, hpad)))            # (DIM, 128)
    b1p = jnp.pad(b1.reshape(1, HIDDEN).astype(jnp.float32),
                  ((0, 0), (0, hpad)))                                      # (1, 128)
    w2row = jnp.pad(w2.reshape(1, HIDDEN).astype(jnp.float32),
                    ((0, 0), (0, hpad)))                                    # (1, 128)
    b2s = b2.reshape(1, 1).astype(jnp.float32)                              # (1, 1) SMEM

    # --- batch tiling: big tiles, no padding of x; ragged last block is masked ---
    if B <= SPLIT_B:
        tile_b = _round_up(max(B, 1), sublane)                # single step
    else:
        # at least 2 grid steps so the parallel batch axis can shard across 2 TCs
        tile_b = min(MAX_TILE_B, _round_up(pl.cdiv(B, 2), sublane))
    grid = (pl.cdiv(B, tile_b),)

    itemsize = jnp.dtype(x.dtype).itemsize
    cost = pl.CostEstimate(
        flops=2 * grid[0] * tile_b * (DIM * HIDDEN_PAD + HIDDEN_PAD),
        transcendentals=0,
        bytes_accessed=(B * DIM * itemsize
                        + (DIM * HIDDEN_PAD + 2 * HIDDEN_PAD + 1) * 4
                        + B * 4),
    )

    out2d = pl.pallas_call(
        mlp_kernel,
        out_shape=jax.ShapeDtypeStruct((B, 1), jnp.float32),
        grid_spec=pltpu.PrefetchScalarGridSpec(
            num_scalar_prefetch=0,
            grid=grid,
            in_specs=[
                pl.BlockSpec((tile_b, DIM), lambda i: (i, 0)),            # x tile (pipelined)
                pl.BlockSpec((DIM, HIDDEN_PAD), lambda i: (0, 0)),        # w1 resident
                pl.BlockSpec((1, HIDDEN_PAD), lambda i: (0, 0)),          # b1 resident
                pl.BlockSpec((1, HIDDEN_PAD), lambda i: (0, 0)),          # w2 row resident
                pl.BlockSpec(memory_space=pltpu.MemorySpace.SMEM),        # b2 scalar
            ],
            out_specs=pl.BlockSpec((tile_b, 1), lambda i: (i, 0)),
        ),
        compiler_params=pltpu.CompilerParams(
            dimension_semantics=("parallel",),
            vmem_limit_bytes=VMEM_LIMIT_BYTES,
        ),
        cost_estimate=cost,
    )(x, w1p, b1p, w2row, b2s)

    # matches PyTorch `x.squeeze(dim=1)` (len(x.size()) > 1 path)
    return out2d[:, 0]


def init_params(key):
    # Mimics PyTorch nn.Linear default init: U(-1/sqrt(fan_in), +1/sqrt(fan_in))
    k1, k2, k3, k4 = jax.random.split(key, 4)
    bound1 = 1.0 / jnp.sqrt(DIM)
    bound2 = 1.0 / jnp.sqrt(HIDDEN)
    w1 = jax.random.uniform(k1, (DIM, HIDDEN), jnp.float32, -bound1, bound1)
    b1 = jax.random.uniform(k2, (HIDDEN,), jnp.float32, -bound1, bound1)
    w2 = jax.random.uniform(k3, (HIDDEN, 1), jnp.float32, -bound2, bound2)
    b2 = jax.random.uniform(k4, (1,), jnp.float32, -bound2, bound2)
    return w1, b1, w2, b2


def _reference(x, w1, b1, w2, b2):
    return (jnp.maximum(x @ w1 + b1[None, :], 0.0) @ w2 + b2[None, :])[:, 0]


if __name__ == "__main__":
    key = jax.random.PRNGKey(0)
    kx, kp = jax.random.split(key)
    w1, b1, w2, b2 = init_params(kp)

    # small, sublane-aligned batch
    batch = 8
    x = jax.random.normal(kx, (batch, DIM), jnp.float32)
    y = mymodel_forward(x, w1, b1, w2, b2)
    jax.block_until_ready(y)
    assert y.shape == (batch,)
    assert jnp.allclose(y, _reference(x, w1, b1, w2, b2), atol=1e-5, rtol=1e-5)

    # ragged batch (not a tile multiple): exercises the masked last block
    # (no jnp.pad of x in the wrapper anymore)
    batch2 = 13
    x2 = jax.random.normal(jax.random.PRNGKey(1), (batch2, DIM), jnp.float32)
    y2 = mymodel_forward(x2, w1, b1, w2, b2)
    jax.block_until_ready(y2)
    assert y2.shape == (batch2,)
    assert jnp.allclose(y2, _reference(x2, w1, b1, w2, b2), atol=1e-5, rtol=1e-5)

    print("KERNEL_OK")
</pallas_src>

<mosaic_0001>
module attributes {stable_mosaic.version = 11 : i64} {
  func.func @mlp_kernel(%arg0: i32, %arg1: memref<8x93xf32, #tpu.memory_space<vmem>>, %arg2: memref<93x128xf32, #tpu.memory_space<vmem>>, %arg3: memref<1x128xf32, #tpu.memory_space<vmem>>, %arg4: memref<1x128xf32, #tpu.memory_space<vmem>>, %arg5: memref<1x1xf32, #tpu.memory_space<smem>>, %arg6: memref<8x1xf32, #tpu.memory_space<vmem>>) attributes {dimension_semantics = [#tpu.dimension_semantics<parallel>], iteration_bounds = array<i64: 1>, scalar_prefetch = 0 : i64, scratch_operands = 0 : i64, tpu.core_type = #tpu.core_type<tc>, window_params = [{transform_indices = @transform_0, window_bounds = array<i64: 8, 93>}, {pipeline_mode = #tpu.pipeline_mode<synchronous>, transform_indices = @transform_1, window_bounds = array<i64: 93, 128>}, {pipeline_mode = #tpu.pipeline_mode<synchronous>, transform_indices = @transform_2, window_bounds = array<i64: 1, 128>}, {pipeline_mode = #tpu.pipeline_mode<synchronous>, transform_indices = @transform_3, window_bounds = array<i64: 1, 128>}, {transform_indices = @transform_4, window_bounds = array<i64: 1, 1>}, {transform_indices = @transform_5, window_bounds = array<i64: 8, 1>}]} {
    %c0 = arith.constant 0 : index
    %c0_0 = arith.constant 0 : index
    %0 = vector.load %arg1[%c0, %c0_0] : memref<8x93xf32, #tpu.memory_space<vmem>>, vector<8x93xf32>
    %c0_1 = arith.constant 0 : index
    %c0_2 = arith.constant 0 : index
    %1 = vector.load %arg2[%c0_1, %c0_2] : memref<93x128xf32, #tpu.memory_space<vmem>>, vector<93x128xf32>
    %cst = arith.constant dense<0.000000e+00> : vector<8x128xf32>
    %2 = tpu.matmul %0, %1, %cst {dimension_numbers = #tpu.dot_dimension_numbers<[1], [0], [0], [1], [0, 0, 1, 1], [], []>} : vector<8x93xf32>, vector<93x128xf32>, vector<8x128xf32> -> vector<8x128xf32>
    %c0_3 = arith.constant 0 : index
    %c0_4 = arith.constant 0 : index
    %3 = vector.load %arg3[%c0_3, %c0_4] : memref<1x128xf32, #tpu.memory_space<vmem>>, vector<1x128xf32>
    %4 = vector.broadcast %3 : vector<1x128xf32> to vector<8x128xf32>
    %5 = arith.addf %2, %4 : vector<8x128xf32>
    %cst_5 = arith.constant 0.000000e+00 : f32
    %6 = vector.broadcast %cst_5 : f32 to vector<8x128xf32>
    %7 = arith.maximumf %5, %6 : vector<8x128xf32>
    %c0_6 = arith.constant 0 : index
    %c0_7 = arith.constant 0 : index
    %8 = vector.load %arg4[%c0_6, %c0_7] : memref<1x128xf32, #tpu.memory_space<vmem>>, vector<1x128xf32>
    %9 = vector.broadcast %8 : vector<1x128xf32> to vector<8x128xf32>
    %10 = arith.mulf %7, %9 : vector<8x128xf32>
    %cst_8 = arith.constant dense<0.000000e+00> : vector<8xf32>
    %11 = vector.multi_reduction <add>, %10, %cst_8 [1] : vector<8x128xf32> to vector<8xf32>
    %12 = vector.shape_cast %11 : vector<8xf32> to vector<8x1xf32>
    %c0_9 = arith.constant 0 : index
    %c0_10 = arith.constant 0 : index
    %13 = memref.load %arg5[%c0_9, %c0_10] : memref<1x1xf32, #tpu.memory_space<smem>>
    %14 = vector.broadcast %13 : f32 to vector<8x1xf32>
    %15 = arith.addf %12, %14 : vector<8x1xf32>
    %c0_11 = arith.constant 0 : index
    %c0_12 = arith.constant 0 : index
    %16 = vector.load %arg6[%c0_11, %c0_12] : memref<8x1xf32, #tpu.memory_space<vmem>>, vector<8x1xf32>
    tpu.vector_store %arg6[%c0_11, %c0_12], %15 {strides = array<i32>} : memref<8x1xf32, #tpu.memory_space<vmem>>, vector<8x1xf32>,
    return
  }
  func.func @transform_0(%arg0: i32) -> (i32, i32) {
    %c0_i32 = arith.constant 0 : i32
    %c0_i32_0 = arith.constant 0 : i32
    return %arg0, %c0_i32 : i32, i32
  }
  func.func @transform_1(%arg0: i32) -> (i32, i32) {
    %c0_i32 = arith.constant 0 : i32
    %c0_i32_0 = arith.constant 0 : i32
    %c0_i32_1 = arith.constant 0 : i32
    return %c0_i32, %c0_i32_0 : i32, i32
  }
  func.func @transform_2(%arg0: i32) -> (i32, i32) {
    %c0_i32 = arith.constant 0 : i32
    %c0_i32_0 = arith.constant 0 : i32
    %c0_i32_1 = arith.constant 0 : i32
    return %c0_i32, %c0_i32_0 : i32, i32
  }
  func.func @transform_3(%arg0: i32) -> (i32, i32) {
    %c0_i32 = arith.constant 0 : i32
    %c0_i32_0 = arith.constant 0 : i32
    %c0_i32_1 = arith.constant 0 : i32
    return %c0_i32, %c0_i32_0 : i32, i32
  }
  func.func @transform_4(%arg0: i32) -> (i32, i32) {
    %c0_i32 = arith.constant 0 : i32
    %c0_i32_0 = arith.constant 0 : i32
    %c0_i32_1 = arith.constant 0 : i32
    return %c0_i32, %c0_i32_0 : i32, i32
  }
  func.func @transform_5(%arg0: i32) -> (i32, i32) {
    %c0_i32 = arith.constant 0 : i32
    %c0_i32_0 = arith.constant 0 : i32
    return %arg0, %c0_i32 : i32, i32
  }
}

</mosaic_0001>

<llo_original>
// kernel: tpu_custom_call.1
$region0: #{tpu_custom_call.1}
  #allocation0 [shape = 'u32[]', space=smem, size = 0x4, offset = 0x4, fixed_abs, tag = 'smem constant byte address 0x4 - core index']
  #allocation1 [shape = 'u32[72,128]{1,0:T(1,128)}', space=vmem, size = 0x9000, scoped, tag = 'internal scratch']
  #allocation2 [shape = 'f32[1,1]{1,0:T(1,128)S(6)}', space=smem, size = 0x200, scoped, tag = 'scoped memory for tpu_custom_call.1']
  %s0 = inlined_call_operand.hbm [shape: f32[8,93], index: 0, kind: input, shape index: {}]
  %s1 = inlined_call_operand.hbm [shape: f32[93,128], index: 1, kind: input, shape index: {}]
  %s2 = inlined_call_operand.vmem [shape: f32[1,128], index: 2, kind: input, shape index: {}]
  %s3 = inlined_call_operand.vmem [shape: f32[1,128], index: 3, kind: input, shape index: {}]
  %s4 = inlined_call_operand.<no memory space> [shape: f32[1,1], index: 4, kind: input, shape index: {}]
  %s5 = inlined_call_operand.vmem [shape: f32[8,1], index: 5, kind: output, shape index: {}]
  %s6 = sld [smem:[#allocation0]]
  $region38: #{tpu_custom_call.1} parent=0
    _
  %s8 = ssub.s32 1, %s6
  %s9 = scalar_select 0, %s8, %s6
  %10 = sst [smem:[#allocation2]] %s4
  $region1: #{tpu_custom_call.1} parent=0
    #allocation3 [shape = 'u8[4096]{0}', space=vmem, size = 0x1000, scoped, tag = 'input window, operand 0, single buffered']
    #allocation4 [shape = 's32[1]{0}', space=sflag, size = 0x4, scoped, tag = 'scoped memory for tpu_custom_call.1']
    #allocation5 [shape = 'u8[49152]{0}', space=vmem, size = 0xc000, scoped, tag = 'input window, operand 1, single buffered']
    #allocation6 [shape = 's32[1]{0}', space=sflag, size = 0x4, scoped, tag = 'scoped memory for tpu_custom_call.1']
    %11 = vsyncpa [#allocation4], 0
    %12 = vsyncpa [#allocation6], 0
    // Predicated region
    $region2: #{tpu_custom_call.1} parent=1 // pred_check
      _
    $region3: #{tpu_custom_call.1} parent=1 // pred_check_branch
      %14 = sbr.rel (0) target = $region5
    $region4: #{tpu_custom_call.1} parent=1 // pred_region
      %16 = vsyncadd [#allocation4], 0
      %s18 = sshll.u32 %s0, 4
      %s19 = int_to_ptr.hbm [resolvable:$true] %s18
      %s20 = sshll.u32 [#allocation3], 4
      %s21 = int_to_ptr.vmem [resolvable:$true] %s20
      %23 = dma.hbm_to_vmem [thread:$0]  %s19, 128, %s21, [#allocation4]
    $region5: #{tpu_custom_call.1} parent=1 // pred_fallthru
      _
    // Predicated region
    $region6: #{tpu_custom_call.1} parent=1 // pred_check
      _
    $region7: #{tpu_custom_call.1} parent=1 // pred_check_branch
      %25 = sbr.rel (0) target = $region9
    $region8: #{tpu_custom_call.1} parent=1 // pred_region
      %27 = vsyncadd [#allocation6], 0
      %s28 = sshll.u32 %s1, 4
      %s29 = int_to_ptr.hbm [resolvable:$true] %s28
      %s30 = sshll.u32 [#allocation5], 4
      %s31 = int_to_ptr.vmem [resolvable:$true] %s30
      %36 = dma.hbm_to_vmem [thread:$0]  %s29, 1536, %s31, [#allocation6], 128, 128, 8
    $region9: #{tpu_custom_call.1} parent=1 // pred_fallthru
      _
    // Predicated region
    $region10: #{tpu_custom_call.1} parent=1 // pred_check
      _
    $region11: #{tpu_custom_call.1} parent=1 // pred_check_branch
      %38 = sbr.rel (0) target = $region13
    $region12: #{tpu_custom_call.1} parent=1 // pred_region
      _
    $region13: #{tpu_custom_call.1} parent=1 // pred_fallthru
      _
    // Predicated region
    $region14: #{tpu_custom_call.1} parent=1 // pred_check
      _
    $region15: #{tpu_custom_call.1} parent=1 // pred_check_branch
      %40 = sbr.rel (0) target = $region17
    $region16: #{tpu_custom_call.1} parent=1 // pred_region
      _
    $region17: #{tpu_custom_call.1} parent=1 // pred_fallthru
      _
    // Predicated region
    $region18: #{tpu_custom_call.1} parent=1 // pred_check
      _
    $region19: #{tpu_custom_call.1} parent=1 // pred_check_branch
      %42 = sbr.rel (0) target = $region21
    $region20: #{tpu_custom_call.1} parent=1 // pred_region
      _
    $region21: #{tpu_custom_call.1} parent=1 // pred_fallthru
      _
    // Predicated region
    $region22: #{tpu_custom_call.1} parent=1 // pred_check
      _
    $region23: #{tpu_custom_call.1} parent=1 // pred_check_branch
      %44 = sbr.rel (0) target = $region25
    $region24: #{tpu_custom_call.1} parent=1 // pred_region
      %46 = dma.done [#allocation4], 128
    $region25: #{tpu_custom_call.1} parent=1 // pred_fallthru
      _
    // Predicated region
    $region26: #{tpu_custom_call.1} parent=1 // pred_check
      _
    $region27: #{tpu_custom_call.1} parent=1 // pred_check_branch
      %48 = sbr.rel (0) target = $region29
    $region28: #{tpu_custom_call.1} parent=1 // pred_region
      %50 = dma.done [#allocation6], 1536
    $region29: #{tpu_custom_call.1} parent=1 // pred_fallthru
      _
    %v51 = vld [vmem:[#allocation3] sm:$0xff]
    %v52 = vld [vmem:[#allocation5] sm:$0xff]
    %v53 = vld [vmem:[#allocation5 + $0x8] sm:$0xff]
    %v54 = vld [vmem:[#allocation5 + $0x10] sm:$0xff]
    %v55 = vld [vmem:[#allocation5 + $0x18] sm:$0xff]
    %v56 = vld [vmem:[#allocation5 + $0x20] sm:$0xff]
    %v57 = vld [vmem:[#allocation5 + $0x28] sm:$0xff]
    %v58 = vld [vmem:[#allocation5 + $0x30] sm:$0xff]
    %v59 = vld [vmem:[#allocation5 + $0x38] sm:$0xff]
    %v60 = vld [vmem:[#allocation5 + $0x40] sm:$0xff]
    %v61 = vld [vmem:[#allocation5 + $0x48] sm:$0xff]
    %v62 = vld [vmem:[#allocation5 + $0x50] sm:$0xff]
    %v63 = vld [vmem:[#allocation5 + $0x58] sm:$0x1f]
    %v64 = vld [vmem:[%s2] sm:$0x1]
    %v66 = vperm.slane %v64, 0
    %vm68 = vcmask 760832
    %v70 = vsel %vm68, %v51, 0
    %vm72 = vcmask 1044480
    %v74 = vsel %vm72, %v63, 0
    %76 = vmatpush.msra.mxu0 0.0
    %77 = vmatpush.msra.mxu0 0.0
    %78 = vmatpush.msra.mxu0 0.0
    %79 = vmatpush.msra.mxu0 0.0
    %80 = vmatpush.msra.mxu0 %v74
    %81 = vmatpush.msra.mxu0 %v62
    %82 = vmatpush.msra.mxu0 %v61
    %83 = vmatpush.msra.mxu0 %v60
    %84 = vmatpush.msra.mxu0 %v59
    %85 = vmatpush.msra.mxu0 %v58
    %86 = vmatpush.msra.mxu0 %v57
    %87 = vmatpush.msra.mxu0 %v56
    %88 = vmatpush.msra.mxu0 %v55
    %89 = vmatpush.msra.mxu0 %v54
    %90 = vmatpush.msra.mxu0 %v53
    %91 = vmatpush.msra.mxu0 %v52
    %92 = vmatmul.f32.gmra.mxu0 %v70
    %v93 = vpop.f32.mrf.mxu0
    %v94 = vadd.f32 %v66, %v93
    %95 = vdwg.mxu0
    %v96 = vmax.f32 %v94, 0.0
    %v97 = vld [vmem:[%s3] sm:$0x1]
    %v99 = vperm.slane %v97, 0
    %v101 = vmul.f32 %v96, %v99
    %102 = vadd.xlane.f32.xlu0 %v101
    %v103 = vpop.xlane.xlu0 %102
    %s104 = sld [smem:[#allocation2]]
    %v105 = vstv %s104
    %v106 = vadd.f32 %v103, %v105
    %vm107 = vcmask 7168
    %108 = vst.msk [vmem:[%s5] sm:$0xff] %vm107, %v106
    // Predicated region
    $region30: #{tpu_custom_call.1} parent=1 // pred_check
      _
    $region31: #{tpu_custom_call.1} parent=1 // pred_check_branch
      %110 = sbr.rel (0) target = $region33
    $region32: #{tpu_custom_call.1} parent=1 // pred_region
      _
    $region33: #{tpu_custom_call.1} parent=1 // pred_fallthru
      _
    // Predicated region
    $region34: #{tpu_custom_call.1} parent=1 // pred_check
      _
    $region35: #{tpu_custom_call.1} parent=1 // pred_check_branch
      %112 = sbr.rel (0) target = $region37
    $region36: #{tpu_custom_call.1} parent=1 // pred_region
      _
    $region37: #{tpu_custom_call.1} parent=1 // pred_fallthru
      _
    %113 = vsyncpa [#allocation4], 1
    %114 = vsyncpa [#allocation6], 1

</llo_original>
